<compile_context>
chip_gen: v5e
topology: v5e:2x2
jax: 0.10.0
libtpu: 0.0.40
codegen_flags: <defaults>
</compile_context>

<pallas_src>
import functools
import math

import jax
import jax.numpy as jnp
from jax import lax
from jax.experimental import pallas as pl
from jax.experimental.pallas import tpu as pltpu


# ----------------------------------------------------------------------------- helpers
def _round_up(x, m):
    return (x + m - 1) // m * m


def _sigmoid(x):
    return 1.0 / (1.0 + jnp.exp(-x))


def _softplus(x):
    # numerically stable softplus; same formula used in kernels and reference
    return jnp.maximum(x, 0.0) + jnp.log(1.0 + jnp.exp(-jnp.abs(x)))


# ----------------------------------------------------------------------------- kernel 1
def _ln_inproj_kernel(x_ref, g_ref, b_ref, w_ref, o_ref, *, eps):
    x = x_ref[...]                                           # (tm, C)
    mean = jnp.mean(x, axis=-1, keepdims=True)               # one-pass LN stats
    msq = jnp.mean(x * x, axis=-1, keepdims=True)
    var = jnp.maximum(msq - mean * mean, 0.0)
    xn = (x - mean) * lax.rsqrt(var + eps)
    xn = xn * g_ref[...] + b_ref[...]
    o_ref[...] = jnp.dot(xn, w_ref[...],
                         preferred_element_type=jnp.float32).astype(o_ref.dtype)


def _ln_inproj(tokens, g, b, w, *, eps, tm):
    Mp, C = tokens.shape
    E = w.shape[1]
    kernel = functools.partial(_ln_inproj_kernel, eps=eps)
    return pl.pallas_call(
        kernel,
        out_shape=jax.ShapeDtypeStruct((Mp, E), jnp.float32),
        grid_spec=pltpu.PrefetchScalarGridSpec(
            num_scalar_prefetch=0,
            grid=(Mp // tm,),
            in_specs=[
                pl.BlockSpec((tm, C), lambda i: (i, 0)),
                pl.BlockSpec((1, C), lambda i: (0, 0)),
                pl.BlockSpec((1, C), lambda i: (0, 0)),
                pl.BlockSpec((C, E), lambda i: (0, 0)),
            ],
            out_specs=pl.BlockSpec((tm, E), lambda i: (i, 0)),
        ),
        compiler_params=pltpu.CompilerParams(dimension_semantics=("parallel",)),
    )(tokens, g, b, w)


# ----------------------------------------------------------------------------- kernel 2
def _dwconv_silu_kernel(xp_ref, w_ref, b_ref, o_ref, *, H, W, Cin, ksize):
    xp = xp_ref[0]                                           # (H+2p, W+2p, Cin)
    w = w_ref[...]                                           # (k, k, Cin)
    acc = jnp.zeros((H, W, Cin), jnp.float32)
    for dy in range(ksize):
        for dx in range(ksize):
            acc = acc + xp[dy:dy + H, dx:dx + W, :] * w[dy:dy + 1, dx:dx + 1, :]
    acc = acc + b_ref[...]
    o_ref[0, :, :, :] = (acc * _sigmoid(acc)).astype(o_ref.dtype)   # SiLU


def _dwconv_silu(xpad, w3, bconv, *, H, W):
    Bn = xpad.shape[0]
    Hp, Wp, Cin = xpad.shape[1], xpad.shape[2], xpad.shape[3]
    ks = w3.shape[0]
    kernel = functools.partial(_dwconv_silu_kernel, H=H, W=W, Cin=Cin, ksize=ks)
    return pl.pallas_call(
        kernel,
        out_shape=jax.ShapeDtypeStruct((Bn, H, W, Cin), jnp.float32),
        grid_spec=pltpu.PrefetchScalarGridSpec(
            num_scalar_prefetch=0,
            grid=(Bn,),
            in_specs=[
                pl.BlockSpec((1, Hp, Wp, Cin), lambda b: (b, 0, 0, 0)),
                pl.BlockSpec((ks, ks, Cin), lambda b: (0, 0, 0)),
                pl.BlockSpec((1, 1, Cin), lambda b: (0, 0, 0)),
            ],
            out_specs=pl.BlockSpec((1, H, W, Cin), lambda b: (b, 0, 0, 0)),
        ),
        compiler_params=pltpu.CompilerParams(dimension_semantics=("parallel",)),
    )(xpad, w3, bconv)


# ----------------------------------------------------------------------------- kernel 3
def _selective_scan_kernel(u_ref, wdt_ref, wb_ref, wc_ref, dtb_ref, at_ref, d_ref,
                           o_ref, dA_ref, dBu_ref, hs_ref, *, L, N, Din):
    k = pl.program_id(1)
    reverse = k >= 2                                          # directions 2,3 scan backwards

    u = u_ref[0, 0]                                           # (L, Din)
    # dt projection (low-rank already merged into one (Din, Din) matrix), B/C projections
    delta = jnp.dot(u, wdt_ref[0], preferred_element_type=jnp.float32)
    delta = _softplus(delta + dtb_ref[0])                     # (L, Din)
    bs = jnp.dot(u, wb_ref[0], preferred_element_type=jnp.float32)    # (L, N)
    cs = jnp.dot(u, wc_ref[0], preferred_element_type=jnp.float32)    # (L, N)
    at = at_ref[0]                                            # (N, Din) = A^T (negative)
    du = delta * u                                            # (L, Din)

    # Precompute exp(delta*A) and delta*B*u, laid out as (L, N*Din) lane-flattened slabs.
    for n in range(N):
        dA_ref[:, n * Din:(n + 1) * Din] = jnp.exp(delta * at[n:n + 1, :])
        dBu_ref[:, n * Din:(n + 1) * Din] = du * bs[:, n:n + 1]

    def body(l, h):
        p = jnp.where(reverse, L - 1 - l, l)                  # visiting order
        h = dA_ref[pl.ds(p, 1), :] * h + dBu_ref[pl.ds(p, 1), :]
        hs_ref[pl.ds(p, 1), :] = h
        return h

    lax.fori_loop(0, L, body, jnp.zeros((1, N * Din), jnp.float32))

    # y[p, d] = sum_n hs[p, n, d] * C[p, n] + D[d] * u[p, d]   (position-ordered output)
    y = u * d_ref[0]
    for n in range(N):
        y = y + hs_ref[:, n * Din:(n + 1) * Din] * cs[:, n:n + 1]
    o_ref[0, 0, :, :] = y.astype(o_ref.dtype)


def _selective_scan(us, wdtm, wb, wc, dtb, at, dd, *, Bn, K, L, N, Din):
    kernel = functools.partial(_selective_scan_kernel, L=L, N=N, Din=Din)
    return pl.pallas_call(
        kernel,
        out_shape=jax.ShapeDtypeStruct((Bn, K, L, Din), jnp.float32),
        grid_spec=pltpu.PrefetchScalarGridSpec(
            num_scalar_prefetch=0,
            grid=(Bn, K),
            in_specs=[
                pl.BlockSpec((1, 1, L, Din), lambda b, k: (b, k % 2, 0, 0)),  # HW / WH order
                pl.BlockSpec((1, Din, Din), lambda b, k: (k, 0, 0)),
                pl.BlockSpec((1, Din, N), lambda b, k: (k, 0, 0)),
                pl.BlockSpec((1, Din, N), lambda b, k: (k, 0, 0)),
                pl.BlockSpec((1, 1, Din), lambda b, k: (k, 0, 0)),
                pl.BlockSpec((1, N, Din), lambda b, k: (k, 0, 0)),
                pl.BlockSpec((1, 1, Din), lambda b, k: (k, 0, 0)),
            ],
            out_specs=pl.BlockSpec((1, 1, L, Din), lambda b, k: (b, k, 0, 0)),
            scratch_shapes=[pltpu.VMEM((L, N * Din), jnp.float32)] * 3,
        ),
        compiler_params=pltpu.CompilerParams(
            dimension_semantics=("parallel", "arbitrary")),
    )(us, wdtm, wb, wc, dtb, at, dd)


# ----------------------------------------------------------------------------- kernel 4
def _out_gate_proj_kernel(y_ref, z_ref, g_ref, b_ref, w_ref, r_ref, o_ref, *, eps):
    y = y_ref[...]
    mean = jnp.mean(y, axis=-1, keepdims=True)
    msq = jnp.mean(y * y, axis=-1, keepdims=True)
    var = jnp.maximum(msq - mean * mean, 0.0)
    yn = (y - mean) * lax.rsqrt(var + eps)
    yn = yn * g_ref[...] + b_ref[...]
    z = z_ref[...]
    yg = yn * (z * _sigmoid(z))
    out = jnp.dot(yg, w_ref[...], preferred_element_type=jnp.float32) + r_ref[...]
    o_ref[...] = out.astype(o_ref.dtype)


def _out_gate_proj(y, z, g, b, w, r, *, eps, tm):
    Mp, Din = y.shape
    C = w.shape[1]
    kernel = functools.partial(_out_gate_proj_kernel, eps=eps)
    return pl.pallas_call(
        kernel,
        out_shape=jax.ShapeDtypeStruct((Mp, C), jnp.float32),
        grid_spec=pltpu.PrefetchScalarGridSpec(
            num_scalar_prefetch=0,
            grid=(Mp // tm,),
            in_specs=[
                pl.BlockSpec((tm, Din), lambda i: (i, 0)),
                pl.BlockSpec((tm, Din), lambda i: (i, 0)),
                pl.BlockSpec((1, Din), lambda i: (0, 0)),
                pl.BlockSpec((1, Din), lambda i: (0, 0)),
                pl.BlockSpec((Din, C), lambda i: (0, 0)),
                pl.BlockSpec((tm, C), lambda i: (i, 0)),
            ],
            out_specs=pl.BlockSpec((tm, C), lambda i: (i, 0)),
        ),
        compiler_params=pltpu.CompilerParams(dimension_semantics=("parallel",)),
    )(y, z, g, b, w, r)


# ----------------------------------------------------------------------------- forward
def vss_block_forward(x, p, *, d_state=16, d_conv=3, expand=2,
                      ln_eps=1e-6, out_norm_eps=1e-5):
    B, H, W, C = x.shape
    Din = expand * C
    N = d_state
    K = 4
    L = H * W
    M = B * L
    R = p["dt_projs_w"].shape[-1]
    f32 = jnp.float32
    x = x.astype(f32)

    # token tiling: big tiles, pad M so the grid divides evenly
    tm = 512 if M >= 512 else _round_up(M, 8)
    Mp = _round_up(M, tm)

    def pad_rows(a):
        return a if a.shape[0] == Mp else jnp.pad(a, ((0, Mp - a.shape[0]), (0, 0)))

    tokens = x.reshape(M, C)

    # ---- fused LayerNorm (ln_1) + in_proj (lane-dense 2*Din output)
    xz = _ln_inproj(pad_rows(tokens),
                    p["ln1_g"].reshape(1, C).astype(f32),
                    p["ln1_b"].reshape(1, C).astype(f32),
                    p["in_proj_w"].astype(f32),
                    eps=ln_eps, tm=tm)[:M]
    x_inner = xz[:, :Din].reshape(B, H, W, Din)
    z = xz[:, Din:]

    # ---- depthwise conv + SiLU
    pad = (d_conv - 1) // 2
    xpad = jnp.pad(x_inner, ((0, 0), (pad, pad), (pad, pad), (0, 0)))
    w3 = jnp.transpose(p["conv_w"][:, 0], (1, 2, 0)).astype(f32)       # (k, k, Din)
    bconv = p["conv_b"].reshape(1, 1, Din).astype(f32)
    xa = _dwconv_silu(xpad, w3, bconv, H=H, W=W)                        # (B, H, W, Din)

    # ---- scan inputs: two traversal orders; reversed directions handled in-kernel
    u_hw = xa.reshape(B, L, Din)
    u_wh = jnp.transpose(xa, (0, 2, 1, 3)).reshape(B, L, Din)
    us = jnp.stack([u_hw, u_wh], axis=1)                                # (B, 2, L, Din)

    # ---- per-direction parameter prep
    xw = p["x_proj_w"].astype(f32)                                      # (K, R+2N, Din)
    wdtm = jnp.einsum("krd,ker->kde", xw[:, :R, :],
                      p["dt_projs_w"].astype(f32))                      # merged dt weight
    wb = jnp.transpose(xw[:, R:R + N, :], (0, 2, 1))                    # (K, Din, N)
    wc = jnp.transpose(xw[:, R + N:R + 2 * N, :], (0, 2, 1))            # (K, Din, N)
    dtb = p["dt_projs_b"].reshape(K, 1, Din).astype(f32)
    at = jnp.transpose(-jnp.exp(p["A_logs"].astype(f32)), (0, 2, 1))    # (K, N, Din)
    dd = p["Ds"].reshape(K, 1, Din).astype(f32)

    ys = _selective_scan(us, wdtm, wb, wc, dtb, at, dd,
                         Bn=B, K=K, L=L, N=N, Din=Din)                  # (B, K, L, Din)

    # ---- merge four directions (all already in forward position order)
    def wh_to_hw(t):
        return jnp.transpose(t.reshape(B, W, H, Din), (0, 2, 1, 3)).reshape(B, L, Din)

    ysum = ys[:, 0] + ys[:, 2] + wh_to_hw(ys[:, 1]) + wh_to_hw(ys[:, 3])

    # ---- fused out_norm + SiLU(z) gating + out_proj + residual
    out = _out_gate_proj(pad_rows(ysum.reshape(M, Din)),
                         pad_rows(z),
                         p["ln_out_g"].reshape(1, Din).astype(f32),
                         p["ln_out_b"].reshape(1, Din).astype(f32),
                         p["out_proj_w"].astype(f32),
                         pad_rows(tokens),
                         eps=out_norm_eps, tm=tm)[:M]
    # TODO(synk): DropPath / Dropout are identity here (rates are 0 in this configuration).
    return out.reshape(B, H, W, C)


# ----------------------------------------------------------------------------- reference
def vss_block_reference(x, p, *, d_state=16, d_conv=3, expand=2,
                        ln_eps=1e-6, out_norm_eps=1e-5):
    B, H, W, C = x.shape
    Din = expand * C
    N = d_state
    L = H * W
    R = p["dt_projs_w"].shape[-1]
    hp = jax.lax.Precision.HIGHEST
    f32 = jnp.float32
    x = x.astype(f32)

    mu = jnp.mean(x, -1, keepdims=True)
    var = jnp.mean((x - mu) ** 2, -1, keepdims=True)
    xn = (x - mu) / jnp.sqrt(var + ln_eps) * p["ln1_g"] + p["ln1_b"]
    xz = jnp.einsum("bhwc,ce->bhwe", xn, p["in_proj_w"].astype(f32), precision=hp)
    xc, z = xz[..., :Din], xz[..., Din:]

    rhs = jnp.transpose(p["conv_w"], (2, 3, 1, 0)).astype(f32)          # (k, k, 1, Din)
    pad = (d_conv - 1) // 2
    xcv = jax.lax.conv_general_dilated(
        xc, rhs, (1, 1), ((pad, pad), (pad, pad)),
        dimension_numbers=("NHWC", "HWIO", "NHWC"),
        feature_group_count=Din, precision=hp) + p["conv_b"].reshape(1, 1, 1, Din)
    xa = xcv * _sigmoid(xcv)

    x0 = xa.reshape(B, L, Din)
    x1 = jnp.transpose(xa, (0, 2, 1, 3)).reshape(B, L, Din)
    xs = jnp.stack([x0, x1, x0[:, ::-1], x1[:, ::-1]], axis=1)          # (B, 4, L, Din)

    xw = p["x_proj_w"].astype(f32)
    xdbl = jnp.einsum("bkld,kcd->bklc", xs, xw, precision=hp)
    dts, Bs, Cs = xdbl[..., :R], xdbl[..., R:R + N], xdbl[..., R + N:]
    dts = jnp.einsum("bklr,kdr->bkld", dts, p["dt_projs_w"].astype(f32), precision=hp)
    delta = _softplus(dts + p["dt_projs_b"].astype(f32)[None, :, None, :])

    A = -jnp.exp(p["A_logs"].astype(f32))                               # (K, Din, N)
    dA = jnp.exp(delta[..., None] * A[None, :, None, :, :])
    dBu = delta[..., None] * xs[..., None] * Bs[:, :, :, None, :]

    def step(h, inp):
        dA_l, dBu_l, C_l = inp
        h = dA_l * h + dBu_l
        y = jnp.sum(h * C_l[:, :, None, :], axis=-1)
        return h, y

    h0 = jnp.zeros((B, 4, Din, N), f32)
    _, ysq = jax.lax.scan(step, h0, (jnp.moveaxis(dA, 2, 0),
                                     jnp.moveaxis(dBu, 2, 0),
                                     jnp.moveaxis(Cs, 2, 0)))
    ys = jnp.moveaxis(ysq, 0, 2)                                        # (B, 4, L, Din)
    ys = ys + p["Ds"].astype(f32)[None, :, None, :] * xs

    def wh_to_hw(t):
        return jnp.transpose(t.reshape(B, W, H, Din), (0, 2, 1, 3)).reshape(B, L, Din)

    ysum = (ys[:, 0] + ys[:, 2, ::-1] + wh_to_hw(ys[:, 1]) + wh_to_hw(ys[:, 3, ::-1]))
    ysum = ysum.reshape(B, H, W, Din)

    mu = jnp.mean(ysum, -1, keepdims=True)
    var = jnp.mean((ysum - mu) ** 2, -1, keepdims=True)
    yn = (ysum - mu) / jnp.sqrt(var + out_norm_eps) * p["ln_out_g"] + p["ln_out_b"]
    yg = yn * (z * _sigmoid(z))
    out = jnp.einsum("bhwd,dc->bhwc", yg, p["out_proj_w"].astype(f32), precision=hp) + x
    return out


# ----------------------------------------------------------------------------- main
if __name__ == "__main__":
    B, H, W, C = 2, 8, 8, 32
    d_state, d_conv, expand = 16, 3, 2
    Din = expand * C
    K = 4
    R = math.ceil(C / 16)                      # dt_rank='auto'
    f32 = jnp.float32

    key = jax.random.PRNGKey(0)
    ks = jax.random.split(key, 12)

    x = jax.random.normal(ks[0], (B, H, W, C), dtype=f32)

    params = {
        "ln1_g": 1.0 + 0.1 * jax.random.normal(ks[1], (C,), dtype=f32),
        "ln1_b": 0.1 * jax.random.normal(ks[2], (C,), dtype=f32),
        "in_proj_w": (C ** -0.5) * jax.random.normal(ks[3], (C, 2 * Din), dtype=f32),
        "conv_w": 0.2 * jax.random.normal(ks[4], (Din, 1, d_conv, d_conv), dtype=f32),
        "conv_b": 0.1 * jax.random.normal(ks[5], (Din,), dtype=f32),
        "x_proj_w": (Din ** -0.5) * jax.random.normal(ks[6], (K, R + 2 * d_state, Din), dtype=f32),
        "dt_projs_w": (R ** -0.5) * jax.random.uniform(ks[7], (K, Din, R), dtype=f32,
                                                       minval=-1.0, maxval=1.0),
        "A_logs": jnp.log(jnp.broadcast_to(jnp.arange(1, d_state + 1, dtype=f32),
                                           (K, Din, d_state))),
        "Ds": jnp.ones((K, Din), dtype=f32),
        "ln_out_g": 1.0 + 0.1 * jax.random.normal(ks[8], (Din,), dtype=f32),
        "ln_out_b": 0.1 * jax.random.normal(ks[9], (Din,), dtype=f32),
        "out_proj_w": (Din ** -0.5) * jax.random.normal(ks[10], (Din, C), dtype=f32),
    }
    # dt bias: inverse softplus of dt ~ logU[1e-3, 1e-1] (as in SS2D.dt_init)
    dt = jnp.exp(jax.random.uniform(ks[11], (K, Din), dtype=f32)
                 * (math.log(0.1) - math.log(0.001)) + math.log(0.001))
    dt = jnp.maximum(dt, 1e-4)
    params["dt_projs_b"] = dt + jnp.log(-jnp.expm1(-dt))

    out = vss_block_forward(x, params, d_state=d_state, d_conv=d_conv, expand=expand)
    out = jax.block_until_ready(out)

    ref = vss_block_reference(x, params, d_state=d_state, d_conv=d_conv, expand=expand)
    assert out.shape == (B, H, W, C), out.shape
    max_err = float(jnp.max(jnp.abs(out - ref)))
    assert jnp.allclose(out, ref, atol=2e-3, rtol=2e-3), max_err

    print("KERNEL_OK")
</pallas_src>

<mosaic_0001>
module attributes {stable_mosaic.version = 11 : i64} {
  func.func @_ln_inproj_kernel(%arg0: i32, %arg1: memref<128x32xf32, #tpu.memory_space<vmem>>, %arg2: memref<1x32xf32, #tpu.memory_space<vmem>>, %arg3: memref<1x32xf32, #tpu.memory_space<vmem>>, %arg4: memref<32x128xf32, #tpu.memory_space<vmem>>, %arg5: memref<128x128xf32, #tpu.memory_space<vmem>>) attributes {dimension_semantics = [#tpu.dimension_semantics<parallel>], iteration_bounds = array<i64: 1>, scalar_prefetch = 0 : i64, scratch_operands = 0 : i64, tpu.core_type = #tpu.core_type<tc>, window_params = [{transform_indices = @transform_0, window_bounds = array<i64: 128, 32>}, {pipeline_mode = #tpu.pipeline_mode<synchronous>, transform_indices = @transform_1, window_bounds = array<i64: 1, 32>}, {pipeline_mode = #tpu.pipeline_mode<synchronous>, transform_indices = @transform_2, window_bounds = array<i64: 1, 32>}, {pipeline_mode = #tpu.pipeline_mode<synchronous>, transform_indices = @transform_3, window_bounds = array<i64: 32, 128>}, {transform_indices = @transform_4, window_bounds = array<i64: 128, 128>}]} {
    %c0 = arith.constant 0 : index
    %c0_0 = arith.constant 0 : index
    %0 = vector.load %arg1[%c0, %c0_0] : memref<128x32xf32, #tpu.memory_space<vmem>>, vector<128x32xf32>
    %cst = arith.constant dense<0.000000e+00> : vector<128xf32>
    %1 = vector.multi_reduction <add>, %0, %cst [1] : vector<128x32xf32> to vector<128xf32>
    %2 = vector.shape_cast %1 : vector<128xf32> to vector<128x1xf32>
    %cst_1 = arith.constant 3.200000e+01 : f32
    %3 = vector.broadcast %cst_1 : f32 to vector<128x1xf32>
    %4 = arith.divf %2, %3 : vector<128x1xf32>
    %5 = arith.mulf %0, %0 : vector<128x32xf32>
    %cst_2 = arith.constant dense<0.000000e+00> : vector<128xf32>
    %6 = vector.multi_reduction <add>, %5, %cst_2 [1] : vector<128x32xf32> to vector<128xf32>
    %7 = vector.shape_cast %6 : vector<128xf32> to vector<128x1xf32>
    %cst_3 = arith.constant 3.200000e+01 : f32
    %8 = vector.broadcast %cst_3 : f32 to vector<128x1xf32>
    %9 = arith.divf %7, %8 : vector<128x1xf32>
    %10 = arith.mulf %4, %4 : vector<128x1xf32>
    %11 = arith.subf %9, %10 : vector<128x1xf32>
    %cst_4 = arith.constant 0.000000e+00 : f32
    %12 = vector.broadcast %cst_4 : f32 to vector<128x1xf32>
    %13 = arith.maximumf %11, %12 : vector<128x1xf32>
    %14 = vector.broadcast %4 : vector<128x1xf32> to vector<128x32xf32>
    %15 = arith.subf %0, %14 : vector<128x32xf32>
    %cst_5 = arith.constant 9.99999997E-7 : f32
    %16 = vector.broadcast %cst_5 : f32 to vector<128x1xf32>
    %17 = arith.addf %13, %16 : vector<128x1xf32>
    %18 = math.rsqrt %17 : vector<128x1xf32>
    %19 = vector.broadcast %18 : vector<128x1xf32> to vector<128x32xf32>
    %20 = arith.mulf %15, %19 : vector<128x32xf32>
    %c0_6 = arith.constant 0 : index
    %c0_7 = arith.constant 0 : index
    %21 = vector.load %arg2[%c0_6, %c0_7] : memref<1x32xf32, #tpu.memory_space<vmem>>, vector<1x32xf32>
    %22 = vector.broadcast %21 : vector<1x32xf32> to vector<128x32xf32>
    %23 = arith.mulf %20, %22 : vector<128x32xf32>
    %c0_8 = arith.constant 0 : index
    %c0_9 = arith.constant 0 : index
    %24 = vector.load %arg3[%c0_8, %c0_9] : memref<1x32xf32, #tpu.memory_space<vmem>>, vector<1x32xf32>
    %25 = vector.broadcast %24 : vector<1x32xf32> to vector<128x32xf32>
    %26 = arith.addf %23, %25 : vector<128x32xf32>
    %c0_10 = arith.constant 0 : index
    %c0_11 = arith.constant 0 : index
    %27 = vector.load %arg4[%c0_10, %c0_11] : memref<32x128xf32, #tpu.memory_space<vmem>>, vector<32x128xf32>
    %cst_12 = arith.constant dense<0.000000e+00> : vector<128x128xf32>
    %28 = tpu.matmul %26, %27, %cst_12 {dimension_numbers = #tpu.dot_dimension_numbers<[1], [0], [0], [1], [0, 0, 1, 1], [], []>} : vector<128x32xf32>, vector<32x128xf32>, vector<128x128xf32> -> vector<128x128xf32>
    %c0_13 = arith.constant 0 : index
    %c0_14 = arith.constant 0 : index
    %29 = vector.load %arg5[%c0_13, %c0_14] : memref<128x128xf32, #tpu.memory_space<vmem>>, vector<128x128xf32>
    tpu.vector_store %arg5[%c0_13, %c0_14], %28 {strides = array<i32>} : memref<128x128xf32, #tpu.memory_space<vmem>>, vector<128x128xf32>,
    return
  }
  func.func @transform_0(%arg0: i32) -> (i32, i32) {
    %c0_i32 = arith.constant 0 : i32
    %c0_i32_0 = arith.constant 0 : i32
    return %arg0, %c0_i32 : i32, i32
  }
  func.func @transform_1(%arg0: i32) -> (i32, i32) {
    %c0_i32 = arith.constant 0 : i32
    %c0_i32_0 = arith.constant 0 : i32
    %c0_i32_1 = arith.constant 0 : i32
    return %c0_i32, %c0_i32_0 : i32, i32
  }
  func.func @transform_2(%arg0: i32) -> (i32, i32) {
    %c0_i32 = arith.constant 0 : i32
    %c0_i32_0 = arith.constant 0 : i32
    %c0_i32_1 = arith.constant 0 : i32
    return %c0_i32, %c0_i32_0 : i32, i32
  }
  func.func @transform_3(%arg0: i32) -> (i32, i32) {
    %c0_i32 = arith.constant 0 : i32
    %c0_i32_0 = arith.constant 0 : i32
    %c0_i32_1 = arith.constant 0 : i32
    return %c0_i32, %c0_i32_0 : i32, i32
  }
  func.func @transform_4(%arg0: i32) -> (i32, i32) {
    %c0_i32 = arith.constant 0 : i32
    %c0_i32_0 = arith.constant 0 : i32
    return %arg0, %c0_i32 : i32, i32
  }
}

</mosaic_0001>

<llo_original>
// kernel: tpu_custom_call.1
$region0: #{tpu_custom_call.1}
  #allocation0 [shape = 'u32[]', space=smem, size = 0x4, offset = 0x4, fixed_abs, tag = 'smem constant byte address 0x4 - core index']
  #allocation1 [shape = 'u32[72,128]{1,0:T(1,128)}', space=vmem, size = 0x9000, scoped, tag = 'internal scratch']
  %s0 = inlined_call_operand.vmem [shape: f32[128,32], index: 0, kind: input, shape index: {}]
  %s1 = inlined_call_operand.vmem [shape: f32[1,32], index: 1, kind: input, shape index: {}]
  %s2 = inlined_call_operand.vmem [shape: f32[1,32], index: 2, kind: input, shape index: {}]
  %s3 = inlined_call_operand.vmem [shape: f32[32,128], index: 3, kind: input, shape index: {}]
  %s4 = inlined_call_operand.hbm [shape: f32[128,128], index: 4, kind: output, shape index: {}]
  %s5 = sld [smem:[#allocation0]]
  $region26: #{tpu_custom_call.1} parent=0
    _
  %s7 = ssub.s32 1, %s5
  %s8 = scalar_select 0, %s7, %s5
  $region1: #{tpu_custom_call.1} parent=0
    #allocation2 [shape = 'u8[65536]{0}', space=vmem, size = 0x10000, scoped, tag = 'output window, operand 0, single buffered']
    #allocation3 [shape = 's32[1]{0}', space=sflag, size = 0x4, scoped, tag = 'scoped memory for tpu_custom_call.1']
    %9 = vsyncpa [#allocation3], 0
    // Predicated region
    $region2: #{tpu_custom_call.1} parent=1 // pred_check
      _
    $region3: #{tpu_custom_call.1} parent=1 // pred_check_branch
      %11 = sbr.rel (0) target = $region5
    $region4: #{tpu_custom_call.1} parent=1 // pred_region
      _
    $region5: #{tpu_custom_call.1} parent=1 // pred_fallthru
      _
    // Predicated region
    $region6: #{tpu_custom_call.1} parent=1 // pred_check
      _
    $region7: #{tpu_custom_call.1} parent=1 // pred_check_branch
      %13 = sbr.rel (0) target = $region9
    $region8: #{tpu_custom_call.1} parent=1 // pred_region
      _
    $region9: #{tpu_custom_call.1} parent=1 // pred_fallthru
      _
    // Predicated region
    $region10: #{tpu_custom_call.1} parent=1 // pred_check
      _
    $region11: #{tpu_custom_call.1} parent=1 // pred_check_branch
      %15 = sbr.rel (0) target = $region13
    $region12: #{tpu_custom_call.1} parent=1 // pred_region
      _
    $region13: #{tpu_custom_call.1} parent=1 // pred_fallthru
      _
    // Predicated region
    $region14: #{tpu_custom_call.1} parent=1 // pred_check
      _
    $region15: #{tpu_custom_call.1} parent=1 // pred_check_branch
      %17 = sbr.rel (0) target = $region17
    $region16: #{tpu_custom_call.1} parent=1 // pred_region
      _
    $region17: #{tpu_custom_call.1} parent=1 // pred_fallthru
      _
    %v18 = vld [vmem:[%s0] sm:$0xff]
    %v19 = vld [vmem:[%s0 + $0x8] sm:$0xff]
    %v20 = vld [vmem:[%s0 + $0x10] sm:$0xff]
    %v21 = vld [vmem:[%s0 + $0x18] sm:$0xff]
    %v22 = vld [vmem:[%s0 + $0x20] sm:$0xff]
    %v23 = vld [vmem:[%s0 + $0x28] sm:$0xff]
    %v24 = vld [vmem:[%s0 + $0x30] sm:$0xff]
    %v25 = vld [vmem:[%s0 + $0x38] sm:$0xff]
    %v26 = vld [vmem:[%s0 + $0x40] sm:$0xff]
    %v27 = vld [vmem:[%s0 + $0x48] sm:$0xff]
    %v28 = vld [vmem:[%s0 + $0x50] sm:$0xff]
    %v29 = vld [vmem:[%s0 + $0x58] sm:$0xff]
    %v30 = vld [vmem:[%s0 + $0x60] sm:$0xff]
    %v31 = vld [vmem:[%s0 + $0x68] sm:$0xff]
    %v32 = vld [vmem:[%s0 + $0x70] sm:$0xff]
    %v33 = vld [vmem:[%s0 + $0x78] sm:$0xff]
    %vm34 = vcmask 261120
    %v35 = vsel %vm34, %v18, 0.0
    %36 = vadd.xlane.f32.xlu0 %v35
    %v37 = vpop.xlane.xlu0 %36
    %v38 = vsel %vm34, %v19, 0.0
    %39 = vadd.xlane.f32.xlu0 %v38
    %v40 = vpop.xlane.xlu0 %39
    %v41 = vsel %vm34, %v20, 0.0
    %42 = vadd.xlane.f32.xlu0 %v41
    %v43 = vpop.xlane.xlu0 %42
    %v44 = vsel %vm34, %v21, 0.0
    %45 = vadd.xlane.f32.xlu0 %v44
    %v46 = vpop.xlane.xlu0 %45
    %v47 = vsel %vm34, %v22, 0.0
    %48 = vadd.xlane.f32.xlu0 %v47
    %v49 = vpop.xlane.xlu0 %48
    %v50 = vsel %vm34, %v23, 0.0
    %51 = vadd.xlane.f32.xlu0 %v50
    %v52 = vpop.xlane.xlu0 %51
    %v53 = vsel %vm34, %v24, 0.0
    %54 = vadd.xlane.f32.xlu0 %v53
    %v55 = vpop.xlane.xlu0 %54
    %v56 = vsel %vm34, %v25, 0.0
    %57 = vadd.xlane.f32.xlu0 %v56
    %v58 = vpop.xlane.xlu0 %57
    %v59 = vsel %vm34, %v26, 0.0
    %60 = vadd.xlane.f32.xlu0 %v59
    %v61 = vpop.xlane.xlu0 %60
    %v62 = vsel %vm34, %v27, 0.0
    %63 = vadd.xlane.f32.xlu0 %v62
    %v64 = vpop.xlane.xlu0 %63
    %v65 = vsel %vm34, %v28, 0.0
    %66 = vadd.xlane.f32.xlu0 %v65
    %v67 = vpop.xlane.xlu0 %66
    %v68 = vsel %vm34, %v29, 0.0
    %69 = vadd.xlane.f32.xlu0 %v68
    %v70 = vpop.xlane.xlu0 %69
    %v71 = vsel %vm34, %v30, 0.0
    %72 = vadd.xlane.f32.xlu0 %v71
    %v73 = vpop.xlane.xlu0 %72
    %v74 = vsel %vm34, %v31, 0.0
    %75 = vadd.xlane.f32.xlu0 %v74
    %v76 = vpop.xlane.xlu0 %75
    %v77 = vsel %vm34, %v32, 0.0
    %78 = vadd.xlane.f32.xlu0 %v77
    %v79 = vpop.xlane.xlu0 %78
    %v80 = vsel %vm34, %v33, 0.0
    %81 = vadd.xlane.f32.xlu0 %v80
    %v82 = vpop.xlane.xlu0 %81
    %v83 = vrcp.pop 32.0
    %v84 = vmul.f32 32.0, %v83
    %v85 = vsub.f32 1.0, %v84
    %v86 = vmul.f32 %v83, %v85
    %v87 = vadd.f32 %v83, %v86
    %vm88 = vweird.f32 %v83
    %v89 = vsel %vm88, %v83, %v87
    %v90 = vmul.f32 %v37, %v89
    %v91 = vmul.f32 %v40, %v89
    %v92 = vmul.f32 %v43, %v89
    %v93 = vmul.f32 %v46, %v89
    %v94 = vmul.f32 %v49, %v89
    %v95 = vmul.f32 %v52, %v89
    %v96 = vmul.f32 %v55, %v89
    %v97 = vmul.f32 %v58, %v89
    %v98 = vmul.f32 %v61, %v89
    %v99 = vmul.f32 %v64, %v89
    %v100 = vmul.f32 %v67, %v89
    %v101 = vmul.f32 %v70, %v89
    %v102 = vmul.f32 %v73, %v89
    %v103 = vmul.f32 %v76, %v89
    %v104 = vmul.f32 %v79, %v89
    %v105 = vmul.f32 %v82, %v89
    %v106 = vmul.f32 %v18, %v18
    %v107 = vmul.f32 %v19, %v19
    %v108 = vmul.f32 %v20, %v20
    %v109 = vmul.f32 %v21, %v21
    %v110 = vmul.f32 %v22, %v22
    %v111 = vmul.f32 %v23, %v23
    %v112 = vmul.f32 %v24, %v24
    %v113 = vmul.f32 %v25, %v25
    %v114 = vmul.f32 %v26, %v26
    %v115 = vmul.f32 %v27, %v27
    %v116 = vmul.f32 %v28, %v28
    %v117 = vmul.f32 %v29, %v29
    %v118 = vmul.f32 %v30, %v30
    %v119 = vmul.f32 %v31, %v31
    %v120 = vmul.f32 %v32, %v32
    %v121 = vmul.f32 %v33, %v33
    %v122 = vsel %vm34, %v106, 0.0
    %123 = vadd.xlane.f32.xlu0 %v122
    %v124 = vpop.xlane.xlu0 %123
    %v125 = vsel %vm34, %v107, 0.0
    %126 = vadd.xlane.f32.xlu0 %v125
    %v127 = vpop.xlane.xlu0 %126
    %v128 = vsel %vm34, %v108, 0.0
    %129 = vadd.xlane.f32.xlu0 %v128
    %v130 = vpop.xlane.xlu0 %129
    %v131 = vsel %vm34, %v109, 0.0
    %132 = vadd.xlane.f32.xlu0 %v131
    %v133 = vpop.xlane.xlu0 %132
    %v134 = vsel %vm34, %v110, 0.0
    %135 = vadd.xlane.f32.xlu0 %v134
    %v136 = vpop.xlane.xlu0 %135
    %v137 = vsel %vm34, %v111, 0.0
    %138 = vadd.xlane.f32.xlu0 %v137
    %v139 = vpop.xlane.xlu0 %138
    %v140 = vsel %vm34, %v112, 0.0
    %141 = vadd.xlane.f32.xlu0 %v140
    %v142 = vpop.xlane.xlu0 %141
    %v143 = vsel %vm34, %v113, 0.0
    %144 = vadd.xlane.f32.xlu0 %v143
    %v145 = vpop.xlane.xlu0 %144
    %v146 = vsel %vm34, %v114, 0.0
    %147 = vadd.xlane.f32.xlu0 %v146
    %v148 = vpop.xlane.xlu0 %147
    %v149 = vsel %vm34, %v115, 0.0
    %150 = vadd.xlane.f32.xlu0 %v149
    %v151 = vpop.xlane.xlu0 %150
    %v152 = vsel %vm34, %v116, 0.0
    %153 = vadd.xlane.f32.xlu0 %v152
    %v154 = vpop.xlane.xlu0 %153
    %v155 = vsel %vm34, %v117, 0.0
    %156 = vadd.xlane.f32.xlu0 %v155
    %v157 = vpop.xlane.xlu0 %156
    %v158 = vsel %vm34, %v118, 0.0
    %159 = vadd.xlane.f32.xlu0 %v158
    %v160 = vpop.xlane.xlu0 %159
    %v161 = vsel %vm34, %v119, 0.0
    %162 = vadd.xlane.f32.xlu0 %v161
    %v163 = vpop.xlane.xlu0 %162
    %v164 = vsel %vm34, %v120, 0.0
    %165 = vadd.xlane.f32.xlu0 %v164
    %v166 = vpop.xlane.xlu0 %165
    %v167 = vsel %vm34, %v121, 0.0
    %168 = vadd.xlane.f32.xlu0 %v167
    %v169 = vpop.xlane.xlu0 %168
    %v170 = vmul.f32 %v124, %v89
    %v171 = vmul.f32 %v127, %v89
    %v172 = vmul.f32 %v130, %v89
    %v173 = vmul.f32 %v133, %v89
    %v174 = vmul.f32 %v136, %v89
    %v175 = vmul.f32 %v139, %v89
    %v176 = vmul.f32 %v142, %v89
    %v177 = vmul.f32 %v145, %v89
    %v178 = vmul.f32 %v148, %v89
    %v179 = vmul.f32 %v151, %v89
    %v180 = vmul.f32 %v154, %v89
    %v181 = vmul.f32 %v157, %v89
    %v182 = vmul.f32 %v160, %v89
    %v183 = vmul.f32 %v163, %v89
    %v184 = vmul.f32 %v166, %v89
    %v185 = vmul.f32 %v169, %v89
    %v186 = vmul.f32 %v90, %v90
    %v187 = vmul.f32 %v91, %v91
    %v188 = vmul.f32 %v92, %v92
    %v189 = vmul.f32 %v93, %v93
    %v190 = vmul.f32 %v94, %v94
    %v191 = vmul.f32 %v95, %v95
    %v192 = vmul.f32 %v96, %v96
    %v193 = vmul.f32 %v97, %v97
    %v194 = vmul.f32 %v98, %v98
    %v195 = vmul.f32 %v99, %v99
    %v196 = vmul.f32 %v100, %v100
    %v197 = vmul.f32 %v101, %v101
    %v198 = vmul.f32 %v102, %v102
    %v199 = vmul.f32 %v103, %v103
    %v200 = vmul.f32 %v104, %v104
    %v201 = vmul.f32 %v105, %v105
    %v202 = vsub.f32 %v170, %v186
    %v203 = vsub.f32 %v171, %v187
    %v204 = vsub.f32 %v172, %v188
    %v205 = vsub.f32 %v173, %v189
    %v206 = vsub.f32 %v174, %v190
    %v207 = vsub.f32 %v175, %v191
    %v208 = vsub.f32 %v176, %v192
    %v209 = vsub.f32 %v177, %v193
    %v210 = vsub.f32 %v178, %v194
    %v211 = vsub.f32 %v179, %v195
    %v212 = vsub.f32 %v180, %v196
    %v213 = vsub.f32 %v181, %v197
    %v214 = vsub.f32 %v182, %v198
    %v215 = vsub.f32 %v183, %v199
    %v216 = vsub.f32 %v184, %v200
    %v217 = vsub.f32 %v185, %v201
    %v218 = vmax.f32 %v202, 0.0
    %v219 = vmax.f32 %v203, 0.0
    %v220 = vmax.f32 %v204, 0.0
    %v221 = vmax.f32 %v205, 0.0
    %v222 = vmax.f32 %v206, 0.0
    %v223 = vmax.f32 %v207, 0.0
    %v224 = vmax.f32 %v208, 0.0
    %v225 = vmax.f32 %v209, 0.0
    %v226 = vmax.f32 %v210, 0.0
    %v227 = vmax.f32 %v211, 0.0
    %v228 = vmax.f32 %v212, 0.0
    %v229 = vmax.f32 %v213, 0.0
    %v230 = vmax.f32 %v214, 0.0
    %v231 = vmax.f32 %v215, 0.0
    %v232 = vmax.f32 %v216, 0.0
    %v233 = vmax.f32 %v217, 0.0
    %v234 = vsub.f32 %v18, %v90
    %v235 = vsub.f32 %v19, %v91
    %v236 = vsub.f32 %v20, %v92
    %v237 = vsub.f32 %v21, %v93
    %v238 = vsub.f32 %v22, %v94
    %v239 = vsub.f32 %v23, %v95
    %v240 = vsub.f32 %v24, %v96
    %v241 = vsub.f32 %v25, %v97
    %v242 = vsub.f32 %v26, %v98
    %v243 = vsub.f32 %v27, %v99
    %v244 = vsub.f32 %v28, %v100
    %v245 = vsub.f32 %v29, %v101
    %v246 = vsub.f32 %v30, %v102
    %v247 = vsub.f32 %v31, %v103
    %v248 = vsub.f32 %v32, %v104
    %v249 = vsub.f32 %v33, %v105
    %v250 = vadd.f32 %v218, 1e-06
    %v251 = vadd.f32 %v219, 1e-06
    %v252 = vadd.f32 %v220, 1e-06
    %v253 = vadd.f32 %v221, 1e-06
    %v254 = vadd.f32 %v222, 1e-06
    %v255 = vadd.f32 %v223, 1e-06
    %v256 = vadd.f32 %v224, 1e-06
    %v257 = vadd.f32 %v225, 1e-06
    %v258 = vadd.f32 %v226, 1e-06
    %v259 = vadd.f32 %v227, 1e-06
    %v260 = vadd.f32 %v228, 1e-06
    %v261 = vadd.f32 %v229, 1e-06
    %v262 = vadd.f32 %v230, 1e-06
    %v263 = vadd.f32 %v231, 1e-06
    %v264 = vadd.f32 %v232, 1e-06
    %v265 = vadd.f32 %v233, 1e-06
    %v266 = vrsqrt.pop %v250
    %v267 = vmul.f32 %v266, %v250
    %v268 = vmul.f32 %v267, %v266
    %v269 = vmul.f32 0.5, %v268
    %v270 = vsub.f32 1.5, %v269
    %v271 = vmul.f32 %v266, %v270
    %vm272 = vweird.f32 %v250
    %vm273 = vweird.f32 %v266
    %vm274 = vmor %vm272, %vm273
    %v275 = vsel %vm274, %v266, %v271
    %v276 = vrsqrt.pop %v251
    %v277 = vmul.f32 %v276, %v251
    %v278 = vmul.f32 %v277, %v276
    %v279 = vmul.f32 0.5, %v278
    %v280 = vsub.f32 1.5, %v279
    %v281 = vmul.f32 %v276, %v280
    %vm282 = vweird.f32 %v251
    %vm283 = vweird.f32 %v276
    %vm284 = vmor %vm282, %vm283
    %v285 = vsel %vm284, %v276, %v281
    %v286 = vrsqrt.pop %v252
    %v287 = vmul.f32 %v286, %v252
    %v288 = vmul.f32 %v287, %v286
    %v289 = vmul.f32 0.5, %v288
    %v290 = vsub.f32 1.5, %v289
    %v291 = vmul.f32 %v286, %v290
    %vm292 = vweird.f32 %v252
    %vm293 = vweird.f32 %v286
    %vm294 = vmor %vm292, %vm293
    %v295 = vsel %vm294, %v286, %v291
    %v296 = vrsqrt.pop %v253
    %v297 = vmul.f32 %v296, %v253
    %v298 = vmul.f32 %v297, %v296
    %v299 = vmul.f32 0.5, %v298
    %v300 = vsub.f32 1.5, %v299
    %v301 = vmul.f32 %v296, %v300
    %vm302 = vweird.f32 %v253
    %vm303 = vweird.f32 %v296
    %vm304 = vmor %vm302, %vm303
    %v305 = vsel %vm304, %v296, %v301
    %v306 = vrsqrt.pop %v254
    %v307 = vmul.f32 %v306, %v254
    %v308 = vmul.f32 %v307, %v306
    %v309 = vmul.f32 0.5, %v308
    %v310 = vsub.f32 1.5, %v309
    %v311 = vmul.f32 %v306, %v310
    %vm312 = vweird.f32 %v254
    %vm313 = vweird.f32 %v306
    %vm314 = vmor %vm312, %vm313
    %v315 = vsel %vm314, %v306, %v311
    %v316 = vrsqrt.pop %v255
    %v317 = vmul.f32 %v316, %v255
    %v318 = vmul.f32 %v317, %v316
    %v319 = vmul.f32 0.5, %v318
    %v320 = vsub.f32 1.5, %v319
    %v321 = vmul.f32 %v316, %v320
    %vm322 = vweird.f32 %v255
    %vm323 = vweird.f32 %v316
    %vm324 = vmor %vm322, %vm323
    %v325 = vsel %vm324, %v316, %v321
    %v326 = vrsqrt.pop %v256
    %v327 = vmul.f32 %v326, %v256
    %v328 = vmul.f32 %v327, %v326
    %v329 = vmul.f32 0.5, %v328
    %v330 = vsub.f32 1.5, %v329
    %v331 = vmul.f32 %v326, %v330
    %vm332 = vweird.f32 %v256
    %vm333 = vweird.f32 %v326
    %vm334 = vmor %vm332, %vm333
    %v335 = vsel %vm334, %v326, %v331
    %v336 = vrsqrt.pop %v257
    %v337 = vmul.f32 %v336, %v257
    %v338 = vmul.f32 %v337, %v336
    %v339 = vmul.f32 0.5, %v338
    %v340 = vsub.f32 1.5, %v339
    %v341 = vmul.f32 %v336, %v340
    %vm342 = vweird.f32 %v257
    %vm343 = vweird.f32 %v336
    %vm344 = vmor %vm342, %vm343
    %v345 = vsel %vm344, %v336, %v341
    %v346 = vrsqrt.pop %v258
    %v347 = vmul.f32 %v346, %v258
    %v348 = vmul.f32 %v347, %v346
    %v349 = vmul.f32 0.5, %v348
    %v350 = vsub.f32 1.5, %v349
    %v351 = vmul.f32 %v346, %v350
    %vm352 = vweird.f32 %v258
    %vm353 = vweird.f32 %v346
    %vm354 = vmor %vm352, %vm353
    %v355 = vsel %vm354, %v346, %v351
    %v356 = vrsqrt.pop %v259
    %v357 = vmul.f32 %v356, %v259
    %v358 = vmul.f32 %v357, %v356
    %v359 = vmul.f32 0.5, %v358
    %v360 = vsub.f32 1.5, %v359
    %v361 = vmul.f32 %v356, %v360
    %vm362 = vweird.f32 %v259
    %vm363 = vweird.f32 %v356
    %vm364 = vmor %vm362, %vm363
    %v365 = vsel %vm364, %v356, %v361
    %v366 = vrsqrt.pop %v260
    %v367 = vmul.f32 %v366, %v260
    %v368 = vmul.f32 %v367, %v366
    %v369 = vmul.f32 0.5, %v368
    %v370 = vsub.f32 1.5, %v369
    %v371 = vmul.f32 %v366, %v370
    %vm372 = vweird.f32 %v260
    %vm373 = vweird.f32 %v366
    %vm374 = vmor %vm372, %vm373
    %v375 = vsel %vm374, %v366, %v371
    %v376 = vrsqrt.pop %v261
    %v377 = vmul.f32 %v376, %v261
    %v378 = vmul.f32 %v377, %v376
    %v379 = vmul.f32 0.5, %v378
    %v380 = vsub.f32 1.5, %v379
    %v381 = vmul.f32 %v376, %v380
    %vm382 = vweird.f32 %v261
    %vm383 = vweird.f32 %v376
    %vm384 = vmor %vm382, %vm383
    %v385 = vsel %vm384, %v376, %v381
    %v386 = vrsqrt.pop %v262
    %v387 = vmul.f32 %v386, %v262
    %v388 = vmul.f32 %v387, %v386
    %v389 = vmul.f32 0.5, %v388
    %v390 = vsub.f32 1.5, %v389
    %v391 = vmul.f32 %v386, %v390
    %vm392 = vweird.f32 %v262
    %vm393 = vweird.f32 %v386
    %vm394 = vmor %vm392, %vm393
    %v395 = vsel %vm394, %v386, %v391
    %v396 = vrsqrt.pop %v263
    %v397 = vmul.f32 %v396, %v263
    %v398 = vmul.f32 %v397, %v396
    %v399 = vmul.f32 0.5, %v398
    %v400 = vsub.f32 1.5, %v399
    %v401 = vmul.f32 %v396, %v400
    %vm402 = vweird.f32 %v263
    %vm403 = vweird.f32 %v396
    %vm404 = vmor %vm402, %vm403
    %v405 = vsel %vm404, %v396, %v401
    %v406 = vrsqrt.pop %v264
    %v407 = vmul.f32 %v406, %v264
    %v408 = vmul.f32 %v407, %v406
    %v409 = vmul.f32 0.5, %v408
    %v410 = vsub.f32 1.5, %v409
    %v411 = vmul.f32 %v406, %v410
    %vm412 = vweird.f32 %v264
    %vm413 = vweird.f32 %v406
    %vm414 = vmor %vm412, %vm413
    %v415 = vsel %vm414, %v406, %v411
    %v416 = vrsqrt.pop %v265
    %v417 = vmul.f32 %v416, %v265
    %v418 = vmul.f32 %v417, %v416
    %v419 = vmul.f32 0.5, %v418
    %v420 = vsub.f32 1.5, %v419
    %v421 = vmul.f32 %v416, %v420
    %vm422 = vweird.f32 %v265
    %vm423 = vweird.f32 %v416
    %vm424 = vmor %vm422, %vm423
    %v425 = vsel %vm424, %v416, %v421
    %v426 = vmul.f32 %v234, %v275
    %v427 = vmul.f32 %v235, %v285
    %v428 = vmul.f32 %v236, %v295
    %v429 = vmul.f32 %v237, %v305
    %v430 = vmul.f32 %v238, %v315
    %v431 = vmul.f32 %v239, %v325
    %v432 = vmul.f32 %v240, %v335
    %v433 = vmul.f32 %v241, %v345
    %v434 = vmul.f32 %v242, %v355
    %v435 = vmul.f32 %v243, %v365
    %v436 = vmul.f32 %v244, %v375
    %v437 = vmul.f32 %v245, %v385
    %v438 = vmul.f32 %v246, %v395
    %v439 = vmul.f32 %v247, %v405
    %v440 = vmul.f32 %v248, %v415
    %v441 = vmul.f32 %v249, %v425
    %v442 = vld [vmem:[%s1] sm:$0x1]
    %v444 = vperm.slane %v442, 0
    %v446 = vmul.f32 %v426, %v444
    %v447 = vmul.f32 %v427, %v444
    %v448 = vmul.f32 %v428, %v444
    %v449 = vmul.f32 %v429, %v444
    %v450 = vmul.f32 %v430, %v444
    %v451 = vmul.f32 %v431, %v444
    %v452 = vmul.f32 %v432, %v444
    %v453 = vmul.f32 %v433, %v444
    %v454 = vmul.f32 %v434, %v444
    %v455 = vmul.f32 %v435, %v444
    %v456 = vmul.f32 %v436, %v444
    %v457 = vmul.f32 %v437, %v444
    %v458 = vmul.f32 %v438, %v444
    %v459 = vmul.f32 %v439, %v444
    %v460 = vmul.f32 %v440, %v444
    %v461 = vmul.f32 %v441, %v444
    %v462 = vld [vmem:[%s2] sm:$0x1]
    %v464 = vperm.slane %v462, 0
    %v466 = vadd.f32 %v446, %v464
    %v467 = vadd.f32 %v447, %v464
    %v468 = vadd.f32 %v448, %v464
    %v469 = vadd.f32 %v449, %v464
    %v470 = vadd.f32 %v450, %v464
    %v471 = vadd.f32 %v451, %v464
    %v472 = vadd.f32 %v452, %v464
    %v473 = vadd.f32 %v453, %v464
    %v474 = vadd.f32 %v454, %v464
    %v475 = vadd.f32 %v455, %v464
    %v476 = vadd.f32 %v456, %v464
    %v477 = vadd.f32 %v457, %v464
    %v478 = vadd.f32 %v458, %v464
    %v479 = vadd.f32 %v459, %v464
    %v480 = vadd.f32 %v460, %v464
    %v481 = vadd.f32 %v461, %v464
    %v482 = vld [vmem:[%s3] sm:$0xff]
    %v483 = vld [vmem:[%s3 + $0x8] sm:$0xff]
    %v484 = vld [vmem:[%s3 + $0x10] sm:$0xff]
    %v485 = vld [vmem:[%s3 + $0x18] sm:$0xff]
    %v487 = vsel %vm34, %v466, 0
    %v490 = vsel %vm34, %v467, 0
    %v493 = vsel %vm34, %v468, 0
    %v496 = vsel %vm34, %v469, 0
    %v499 = vsel %vm34, %v470, 0
    %v502 = vsel %vm34, %v471, 0
    %v505 = vsel %vm34, %v472, 0
    %v508 = vsel %vm34, %v473, 0
    %v511 = vsel %vm34, %v474, 0
    %v514 = vsel %vm34, %v475, 0
    %v517 = vsel %vm34, %v476, 0
    %v520 = vsel %vm34, %v477, 0
    %v523 = vsel %vm34, %v478, 0
    %v526 = vsel %vm34, %v479, 0
    %v529 = vsel %vm34, %v480, 0
    %v532 = vsel %vm34, %v481, 0
    %534 = vmatpush.msra.mxu0 0.0
    %535 = vmatpush.msra.mxu0 0.0
    %536 = vmatpush.msra.mxu0 0.0
    %537 = vmatpush.msra.mxu0 0.0
    %538 = vmatpush.msra.mxu0 0.0
    %539 = vmatpush.msra.mxu0 0.0
    %540 = vmatpush.msra.mxu0 0.0
    %541 = vmatpush.msra.mxu0 0.0
    %542 = vmatpush.msra.mxu0 0.0
    %543 = vmatpush.msra.mxu0 0.0
    %544 = vmatpush.msra.mxu0 0.0
    %545 = vmatpush.msra.mxu0 0.0
    %546 = vmatpush.msra.mxu0 %v485
    %547 = vmatpush.msra.mxu0 %v484
    %548 = vmatpush.msra.mxu0 %v483
    %549 = vmatpush.msra.mxu0 %v482
    %550 = vmatmul.f32.gmra.mxu0 %v487
    %v551 = vpop.f32.mrf.mxu0
    %v552 = vadd.f32 0.0, %v551
    %553 = vmatmul.f32.gmra.mxu0 %v490
    %v554 = vpop.f32.mrf.mxu0
    %v555 = vadd.f32 0.0, %v554
    %556 = vmatmul.f32.gmra.mxu0 %v493
    %v557 = vpop.f32.mrf.mxu0
    %v558 = vadd.f32 0.0, %v557
    %559 = vmatmul.f32.gmra.mxu0 %v496
    %v560 = vpop.f32.mrf.mxu0
    %v561 = vadd.f32 0.0, %v560
    %562 = vmatmul.f32.gmra.mxu0 %v499
    %v563 = vpop.f32.mrf.mxu0
    %v564 = vadd.f32 0.0, %v563
    %565 = vmatmul.f32.gmra.mxu0 %v502
    %v566 = vpop.f32.mrf.mxu0
    %v567 = vadd.f32 0.0, %v566
    %568 = vmatmul.f32.gmra.mxu0 %v505
    %v569 = vpop.f32.mrf.mxu0
    %v570 = vadd.f32 0.0, %v569
    %571 = vmatmul.f32.gmra.mxu0 %v508
    %v572 = vpop.f32.mrf.mxu0
    %v573 = vadd.f32 0.0, %v572
    %574 = vmatmul.f32.gmra.mxu0 %v511
    %v575 = vpop.f32.mrf.mxu0
    %v576 = vadd.f32 0.0, %v575
    %577 = vmatmul.f32.gmra.mxu0 %v514
    %v578 = vpop.f32.mrf.mxu0
    %v579 = vadd.f32 0.0, %v578
    %580 = vmatmul.f32.gmra.mxu0 %v517
    %v581 = vpop.f32.mrf.mxu0
    %v582 = vadd.f32 0.0, %v581
    %583 = vmatmul.f32.gmra.mxu0 %v520
    %v584 = vpop.f32.mrf.mxu0
    %v585 = vadd.f32 0.0, %v584
    %586 = vmatmul.f32.gmra.mxu0 %v523
    %v587 = vpop.f32.mrf.mxu0
    %v588 = vadd.f32 0.0, %v587
    %589 = vmatmul.f32.gmra.mxu0 %v526
    %v590 = vpop.f32.mrf.mxu0
    %v591 = vadd.f32 0.0, %v590
    %592 = vmatmul.f32.gmra.mxu0 %v529
    %v593 = vpop.f32.mrf.mxu0
    %v594 = vadd.f32 0.0, %v593
    %595 = vmatmul.f32.gmra.mxu0 %v532
    %v596 = vpop.f32.mrf.mxu0
    %v597 = vadd.f32 0.0, %v596
    %598 = vdwg.mxu0
    %599 = vst [vmem:[#allocation2] sm:$0xff] %v552
    %600 = vst [vmem:[#allocation2 + $0x8] sm:$0xff] %v555
    %601 = vst [vmem:[#allocation2 + $0x10] sm:$0xff] %v558
    %602 = vst [vmem:[#allocation2 + $0x18] sm:$0xff] %v561
    %603 = vst [vmem:[#allocation2 + $0x20] sm:$0xff] %v564
    %604 = vst [vmem:[#allocation2 + $0x28] sm:$0xff] %v567
    %605 = vst [vmem:[#allocation2 + $0x30] sm:$0xff] %v570
    %606 = vst [vmem:[#allocation2 + $0x38] sm:$0xff] %v573
    %607 = vst [vmem:[#allocation2 + $0x40] sm:$0xff] %v576
    %608 = vst [vmem:[#allocation2 + $0x48] sm:$0xff] %v579
    %609 = vst [vmem:[#allocation2 + $0x50] sm:$0xff] %v582
    %610 = vst [vmem:[#allocation2 + $0x58] sm:$0xff] %v585
    %611 = vst [vmem:[#allocation2 + $0x60] sm:$0xff] %v588
    %612 = vst [vmem:[#allocation2 + $0x68] sm:$0xff] %v591
    %613 = vst [vmem:[#allocation2 + $0x70] sm:$0xff] %v594
    %614 = vst [vmem:[#allocation2 + $0x78] sm:$0xff] %v597
    // Predicated region
    $region18: #{tpu_custom_call.1} parent=1 // pred_check
      _
    $region19: #{tpu_custom_call.1} parent=1 // pred_check_branch
      %616 = sbr.rel (0) target = $region21
    $region20: #{tpu_custom_call.1} parent=1 // pred_region
      %618 = vsyncadd [#allocation3], 0
      %s619 = sshll.u32 [#allocation2], 4
      %s620 = int_to_ptr.vmem [resolvable:$true] %s619
      %s621 = sshll.u32 %s4, 4
      %s622 = int_to_ptr.hbm [resolvable:$true] %s621
      %627 = dma.vmem_to_hbm [thread:$0]  %s620, 2048, %s622, [#allocation3], 128, 128, 8
    $region21: #{tpu_custom_call.1} parent=1 // pred_fallthru
      _
    // Predicated region
    $region22: #{tpu_custom_call.1} parent=1 // pred_check
      _
    $region23: #{tpu_custom_call.1} parent=1 // pred_check_branch
      %629 = sbr.rel (0) target = $region25
    $region24: #{tpu_custom_call.1} parent=1 // pred_region
      %631 = dma.done [#allocation3], 2048
    $region25: #{tpu_custom_call.1} parent=1 // pred_fallthru
      _
    %632 = vsyncpa [#allocation3], 1

</llo_original>
